<compile_context>
chip_gen: v5e
topology: v5e:2x2
jax: 0.10.0
libtpu: 0.0.40
codegen_flags: <defaults>
</compile_context>

<pallas_src>
import jax
import jax.numpy as jnp
from jax.experimental import pallas as pl
from jax.experimental.pallas import tpu as pltpu


def _round_up(x, m):
    return ((x + m - 1) // m) * m


def _sublane(dtype):
    # Second-to-last block dim must be a multiple of this (or the full dim).
    return {4: 8, 2: 16, 1: 32}.get(jnp.dtype(dtype).itemsize, 8)


def _vmem_capacity_bytes():
    try:
        cap = int(getattr(pltpu.get_tpu_info(), "vmem_capacity_bytes", 0))
        if cap > 0:
            return cap
    except Exception:
        pass
    return 64 * 1024 * 1024  # conservative (v7x per-TensorCore VMEM)


# -----------------------------------------------------------------------------
# Kernels
# -----------------------------------------------------------------------------
def _readout_block_kernel(x_ref, w_ref, b_ref, o_ref):
    # One MXU matmul over the full K of this block + fused f32 bias add.
    acc = jnp.dot(x_ref[...], w_ref[...], preferred_element_type=jnp.float32)
    o_ref[...] = (acc + b_ref[...].astype(jnp.float32)).astype(o_ref.dtype)


def _readout_ktiled_kernel(x_ref, w_ref, b_ref, o_ref, acc_ref):
    # Rare fallback when K is too large for a single full-K block.
    k = pl.program_id(2)

    @pl.when(k == 0)
    def _():
        acc_ref[...] = jnp.zeros_like(acc_ref)

    acc_ref[...] += jnp.dot(
        x_ref[...], w_ref[...], preferred_element_type=jnp.float32
    )

    @pl.when(k == pl.num_programs(2) - 1)
    def _():
        o_ref[...] = (acc_ref[...] + b_ref[...].astype(jnp.float32)).astype(o_ref.dtype)


# -----------------------------------------------------------------------------
# ReadoutHead: weight/bias padded once at construction (PyTorch __init__ analog)
# -----------------------------------------------------------------------------
class ReadoutHead:
    def __init__(self, weight, bias, compute_dtype=None):
        K, N = weight.shape
        assert bias.shape == (N,)
        self.K, self.N = K, N
        self.Np = _round_up(N, 128)
        pad_n = self.Np - N

        # Pad parameters ONCE so every kernel output is lane-dense (Np % 128 == 0).
        w_pad = jnp.pad(weight, ((0, 0), (0, pad_n))) if pad_n else weight
        b_pad = (jnp.pad(bias, (0, pad_n)) if pad_n else bias).reshape(1, self.Np)
        self.compute_dtype = compute_dtype
        if compute_dtype is not None:
            w_pad = w_pad.astype(compute_dtype)
        self.w_pad = w_pad
        self.b_pad = b_pad

        # Generation-aware VMEM budgeting (v5e/v6e: 128 MiB, v7x: 64 MiB per TC).
        cap = _vmem_capacity_bytes()
        self._vmem_limit = min(int(cap * 0.8), 96 * 1024 * 1024)
        self._tile_budget = int(self._vmem_limit * 0.7)
        self._single_cutoff = min(cap // 8, 8 * 1024 * 1024)

    # -- public forward -------------------------------------------------------
    def __call__(self, x):
        M, K = x.shape
        assert K == self.K
        out_dtype = x.dtype
        if self.compute_dtype is not None:
            x = x.astype(self.compute_dtype)

        xb = x.dtype.itemsize
        wb = self.w_pad.dtype.itemsize
        bb = self.b_pad.dtype.itemsize
        ob = jnp.dtype(out_dtype).itemsize

        single_bytes = M * K * xb + K * self.Np * wb + self.Np * bb + M * self.Np * ob
        if single_bytes <= self._single_cutoff:
            out = self._single_block(x, out_dtype)
        else:
            sub = max(_sublane(x.dtype), _sublane(out_dtype))
            tiles = self._select_fullk_tiles(M, K, xb, wb, ob, bb, sub)
            if tiles is not None:
                tm, tn, gi, gj = tiles
                out = self._fullk(x, out_dtype, tm, tn, gi, gj)
            else:
                out = self._ktiled(x, out_dtype, sub)

        # Keep exact module semantics (output shape (M, N)); padded columns dropped.
        return out[:, : self.N] if self.Np != self.N else out

    # -- path 1: grid-free single block (small problems) -----------------------
    def _single_block(self, x, out_dtype):
        M = x.shape[0]
        return pl.pallas_call(
            _readout_block_kernel,
            out_shape=jax.ShapeDtypeStruct((M, self.Np), out_dtype),
            in_specs=[pl.BlockSpec(memory_space=pltpu.MemorySpace.VMEM)] * 3,
            out_specs=pl.BlockSpec(memory_space=pltpu.MemorySpace.VMEM),
            compiler_params=pltpu.CompilerParams(
                vmem_limit_bytes=self._vmem_limit
            ),
        )(x, self.w_pad, self.b_pad)

    # -- path 2: full-K tiled pipeline (no K axis, no accumulator RMW) ---------
    def _select_fullk_tiles(self, M, K, xb, wb, ob, bb, sub):
        best = None
        for tm_c in (512, 256, 128):
            tm = min(tm_c, _round_up(M, sub))
            for tn_c in (512, 256, 128):
                tn = min(tn_c, self.Np)
                # Double-buffered per-step footprint: x, w, bias, out blocks.
                foot = 2 * (tm * K * xb + K * tn * wb + tn * bb + tm * tn * ob)
                if foot > self._tile_budget:
                    continue
                gi = pl.cdiv(M, tm)
                gj = pl.cdiv(self.Np, tn)
                # Prefer configs giving both v7x cores >=2 (i,j) tiles, then area.
                key = (1 if gi * gj >= 4 else 0, tm * tn, tm)
                if best is None or key > best[0]:
                    best = (key, tm, tn, gi, gj)
        if best is None:
            return None
        _, tm, tn, gi, gj = best
        return tm, tn, gi, gj

    def _fullk(self, x, out_dtype, tm, tn, gi, gj):
        M, K = x.shape
        # j (N tiles) outer, i (M tiles) inner: weight/bias block index depends
        # only on j, so they stay VMEM-resident across all inner i iterations.
        return pl.pallas_call(
            _readout_block_kernel,
            out_shape=jax.ShapeDtypeStruct((M, self.Np), out_dtype),
            grid_spec=pltpu.PrefetchScalarGridSpec(
                num_scalar_prefetch=0,
                grid=(gj, gi),
                in_specs=[
                    pl.BlockSpec((tm, K), lambda j, i: (i, 0)),
                    pl.BlockSpec((K, tn), lambda j, i: (0, j)),
                    pl.BlockSpec((1, tn), lambda j, i: (0, j)),
                ],
                out_specs=pl.BlockSpec((tm, tn), lambda j, i: (i, j)),
            ),
            compiler_params=pltpu.CompilerParams(
                dimension_semantics=("parallel", "parallel"),
                vmem_limit_bytes=self._vmem_limit,
            ),
        )(x, self.w_pad, self.b_pad)

    # -- path 3 (rare): K too large for a full-K block -------------------------
    def _ktiled(self, x, out_dtype, sub):
        M, K = x.shape
        tm = min(512, _round_up(M, sub))
        tn = min(256, self.Np)
        tk = 512
        Kp = _round_up(K, tk)
        # K edge MUST be zero-padded (garbage along K contaminates real rows);
        # M/N edges are handled by cdiv grids + dropped out-of-bounds writes.
        x_p = jnp.pad(x, ((0, 0), (0, Kp - K))) if Kp != K else x
        w_p = (
            jnp.pad(self.w_pad, ((0, Kp - K), (0, 0))) if Kp != K else self.w_pad
        )
        grid = (pl.cdiv(M, tm), pl.cdiv(self.Np, tn), Kp // tk)
        return pl.pallas_call(
            _readout_ktiled_kernel,
            out_shape=jax.ShapeDtypeStruct((M, self.Np), out_dtype),
            grid_spec=pltpu.PrefetchScalarGridSpec(
                num_scalar_prefetch=0,
                grid=grid,
                in_specs=[
                    pl.BlockSpec((tm, tk), lambda i, j, k: (i, k)),
                    pl.BlockSpec((tk, tn), lambda i, j, k: (k, j)),
                    pl.BlockSpec((1, tn), lambda i, j, k: (0, j)),
                ],
                out_specs=pl.BlockSpec((tm, tn), lambda i, j, k: (i, j)),
                scratch_shapes=[pltpu.VMEM((tm, tn), jnp.float32)],
            ),
            compiler_params=pltpu.CompilerParams(
                dimension_semantics=("parallel", "parallel", "arbitrary"),
                vmem_limit_bytes=self._vmem_limit,
            ),
        )(x_p, w_p, self.b_pad)


# Functional convenience wrapper (pads per call; prefer the class for reuse).
def readout_head(x, weight, bias):
    return ReadoutHead(weight, bias)(x)


if __name__ == "__main__":
    key = jax.random.PRNGKey(0)
    kx, kw, kx2, kw2 = jax.random.split(key, 4)

    # Small shapes consistent with the module: batch=8, input_size=32, output_size=16.
    M, input_size, output_size = 8, 32, 16
    x = jax.random.normal(kx, (M, input_size), dtype=jnp.float32)
    # Deterministic parameter init mirroring __init__: randn * 0.01, zeros bias.
    weight = jax.random.normal(kw, (input_size, output_size), dtype=jnp.float32) * 0.01
    bias = jnp.zeros((output_size,), dtype=jnp.float32)

    head = ReadoutHead(weight, bias)
    out = jax.block_until_ready(head(x))
    ref = jnp.matmul(x, weight) + bias
    assert out.shape == (M, output_size)
    assert jnp.allclose(out, ref, atol=1e-5, rtol=1e-5)

    # Larger shapes to exercise the full-K, weight-resident tiled pipeline.
    M2, K2, N2 = 2048, 1024, 1024
    x2 = jax.random.normal(kx2, (M2, K2), dtype=jnp.float32)
    w2 = jax.random.normal(kw2, (K2, N2), dtype=jnp.float32) * 0.01
    b2 = jnp.zeros((N2,), dtype=jnp.float32)
    head2 = ReadoutHead(w2, b2)
    out2 = jax.block_until_ready(head2(x2))
    ref2 = jnp.matmul(x2, w2) + b2
    assert out2.shape == (M2, N2)
    assert jnp.allclose(out2, ref2, atol=1e-2, rtol=1e-2)

    print("KERNEL_OK")
</pallas_src>

<mosaic_0001>
module attributes {stable_mosaic.version = 11 : i64} {
  func.func @_readout_block_kernel(%arg0: memref<8x32xf32, #tpu.memory_space<vmem>>, %arg1: memref<32x128xf32, #tpu.memory_space<vmem>>, %arg2: memref<1x128xf32, #tpu.memory_space<vmem>>, %arg3: memref<8x128xf32, #tpu.memory_space<vmem>>) attributes {dimension_semantics = [], scalar_prefetch = 0 : i64, scratch_operands = 0 : i64, tpu.core_type = #tpu.core_type<tc>} {
    %c0 = arith.constant 0 : index
    %c0_0 = arith.constant 0 : index
    %0 = vector.load %arg0[%c0, %c0_0] : memref<8x32xf32, #tpu.memory_space<vmem>>, vector<8x32xf32>
    %c0_1 = arith.constant 0 : index
    %c0_2 = arith.constant 0 : index
    %1 = vector.load %arg1[%c0_1, %c0_2] : memref<32x128xf32, #tpu.memory_space<vmem>>, vector<32x128xf32>
    %cst = arith.constant dense<0.000000e+00> : vector<8x128xf32>
    %2 = tpu.matmul %0, %1, %cst {dimension_numbers = #tpu.dot_dimension_numbers<[1], [0], [0], [1], [0, 0, 1, 1], [], []>} : vector<8x32xf32>, vector<32x128xf32>, vector<8x128xf32> -> vector<8x128xf32>
    %c0_3 = arith.constant 0 : index
    %c0_4 = arith.constant 0 : index
    %3 = vector.load %arg2[%c0_3, %c0_4] : memref<1x128xf32, #tpu.memory_space<vmem>>, vector<1x128xf32>
    %4 = vector.broadcast %3 : vector<1x128xf32> to vector<8x128xf32>
    %5 = arith.addf %2, %4 : vector<8x128xf32>
    %c0_5 = arith.constant 0 : index
    %c0_6 = arith.constant 0 : index
    %6 = vector.load %arg3[%c0_5, %c0_6] : memref<8x128xf32, #tpu.memory_space<vmem>>, vector<8x128xf32>
    tpu.vector_store %arg3[%c0_5, %c0_6], %5 {strides = array<i32>} : memref<8x128xf32, #tpu.memory_space<vmem>>, vector<8x128xf32>,
    return
  }
}

</mosaic_0001>

<llo_original>
// kernel: tpu_custom_call.1
$region0: #{tpu_custom_call.1}
  #allocation0 [shape = 'u32[]', space=smem, size = 0x4, offset = 0x4, fixed_abs, tag = 'smem constant byte address 0x4 - core index']
  #allocation1 [shape = 'u32[72,128]{1,0:T(1,128)}', space=vmem, size = 0x9000, scoped, tag = 'internal scratch']
  %s0 = inlined_call_operand.hbm [shape: f32[8,32], index: 0, kind: input, shape index: {}]
  %s1 = inlined_call_operand.hbm [shape: f32[32,128], index: 1, kind: input, shape index: {}]
  %s2 = inlined_call_operand.vmem [shape: f32[1,128], index: 2, kind: input, shape index: {}]
  %s3 = inlined_call_operand.hbm [shape: f32[8,128], index: 3, kind: output, shape index: {}]
  %s4 = sld [smem:[#allocation0]]
  $region30: #{tpu_custom_call.1} parent=0
    _
  %s6 = ssub.s32 1, %s4
  %s7 = scalar_select 0, %s6, %s4
  $region1: #{tpu_custom_call.1} parent=0
    #allocation2 [shape = 'u8[4096]{0}', space=vmem, size = 0x1000, scoped, tag = 'input window, operand 0, single buffered']
    #allocation3 [shape = 's32[1]{0}', space=sflag, size = 0x4, scoped, tag = 'scoped memory for tpu_custom_call.1']
    #allocation4 [shape = 's32[1]{0}', space=sflag, size = 0x4, scoped, tag = 'scoped memory for tpu_custom_call.1']
    #allocation5 [shape = 'u8[16384]{0}', space=vmem, size = 0x4000, scoped, tag = 'input window, operand 1, single buffered']
    #allocation6 [shape = 's32[1]{0}', space=sflag, size = 0x4, scoped, tag = 'scoped memory for tpu_custom_call.1']
    #allocation7 [shape = 'u8[4096]{0}', space=vmem, size = 0x1000, scoped, tag = 'output window, operand 0, single buffered']
    %8 = vsyncpa [#allocation3], 0
    %9 = vsyncpa [#allocation6], 0
    %10 = vsyncpa [#allocation4], 0
    // Predicated region
    $region2: #{tpu_custom_call.1} parent=1 // pred_check
      _
    $region3: #{tpu_custom_call.1} parent=1 // pred_check_branch
      %12 = sbr.rel (0) target = $region5
    $region4: #{tpu_custom_call.1} parent=1 // pred_region
      %14 = vsyncadd [#allocation3], 0
      %s16 = sshll.u32 %s0, 4
      %s17 = int_to_ptr.hbm [resolvable:$true] %s16
      %s18 = sshll.u32 [#allocation2], 4
      %s19 = int_to_ptr.vmem [resolvable:$true] %s18
      %21 = dma.hbm_to_vmem [thread:$0]  %s17, 128, %s19, [#allocation3]
    $region5: #{tpu_custom_call.1} parent=1 // pred_fallthru
      _
    // Predicated region
    $region6: #{tpu_custom_call.1} parent=1 // pred_check
      _
    $region7: #{tpu_custom_call.1} parent=1 // pred_check_branch
      %23 = sbr.rel (0) target = $region9
    $region8: #{tpu_custom_call.1} parent=1 // pred_region
      %25 = vsyncadd [#allocation6], 0
      %s26 = sshll.u32 %s1, 4
      %s27 = int_to_ptr.hbm [resolvable:$true] %s26
      %s28 = sshll.u32 [#allocation5], 4
      %s29 = int_to_ptr.vmem [resolvable:$true] %s28
      %34 = dma.hbm_to_vmem [thread:$0]  %s27, 512, %s29, [#allocation6], 128, 128, 8
    $region9: #{tpu_custom_call.1} parent=1 // pred_fallthru
      _
    // Predicated region
    $region10: #{tpu_custom_call.1} parent=1 // pred_check
      _
    $region11: #{tpu_custom_call.1} parent=1 // pred_check_branch
      %36 = sbr.rel (0) target = $region13
    $region12: #{tpu_custom_call.1} parent=1 // pred_region
      _
    $region13: #{tpu_custom_call.1} parent=1 // pred_fallthru
      _
    // Predicated region
    $region14: #{tpu_custom_call.1} parent=1 // pred_check
      _
    $region15: #{tpu_custom_call.1} parent=1 // pred_check_branch
      %38 = sbr.rel (0) target = $region17
    $region16: #{tpu_custom_call.1} parent=1 // pred_region
      %40 = dma.done [#allocation3], 128
    $region17: #{tpu_custom_call.1} parent=1 // pred_fallthru
      _
    // Predicated region
    $region18: #{tpu_custom_call.1} parent=1 // pred_check
      _
    $region19: #{tpu_custom_call.1} parent=1 // pred_check_branch
      %42 = sbr.rel (0) target = $region21
    $region20: #{tpu_custom_call.1} parent=1 // pred_region
      %44 = dma.done [#allocation6], 512
    $region21: #{tpu_custom_call.1} parent=1 // pred_fallthru
      _
    %v45 = vld [vmem:[#allocation2] sm:$0xff]
    %v46 = vld [vmem:[#allocation5] sm:$0xff]
    %v47 = vld [vmem:[#allocation5 + $0x8] sm:$0xff]
    %v48 = vld [vmem:[#allocation5 + $0x10] sm:$0xff]
    %v49 = vld [vmem:[#allocation5 + $0x18] sm:$0xff]
    %v50 = vld [vmem:[%s2] sm:$0x1]
    %v52 = vperm.slane %v50, 0
    %vm54 = vcmask 261120
    %v56 = vsel %vm54, %v45, 0
    %58 = vmatpush.msra.mxu0 0.0
    %59 = vmatpush.msra.mxu0 0.0
    %60 = vmatpush.msra.mxu0 0.0
    %61 = vmatpush.msra.mxu0 0.0
    %62 = vmatpush.msra.mxu0 0.0
    %63 = vmatpush.msra.mxu0 0.0
    %64 = vmatpush.msra.mxu0 0.0
    %65 = vmatpush.msra.mxu0 0.0
    %66 = vmatpush.msra.mxu0 0.0
    %67 = vmatpush.msra.mxu0 0.0
    %68 = vmatpush.msra.mxu0 0.0
    %69 = vmatpush.msra.mxu0 0.0
    %70 = vmatpush.msra.mxu0 %v49
    %71 = vmatpush.msra.mxu0 %v48
    %72 = vmatpush.msra.mxu0 %v47
    %73 = vmatpush.msra.mxu0 %v46
    %74 = vmatmul.f32.gmra.mxu0 %v56
    %v75 = vpop.f32.mrf.mxu0
    %v76 = vadd.f32 %v52, %v75
    %77 = vdwg.mxu0
    %78 = vst [vmem:[#allocation7] sm:$0xff] %v76
    // Predicated region
    $region22: #{tpu_custom_call.1} parent=1 // pred_check
      _
    $region23: #{tpu_custom_call.1} parent=1 // pred_check_branch
      %80 = sbr.rel (0) target = $region25
    $region24: #{tpu_custom_call.1} parent=1 // pred_region
      %82 = vsyncadd [#allocation4], 0
      %s84 = sshll.u32 [#allocation7], 4
      %s85 = int_to_ptr.vmem [resolvable:$true] %s84
      %s86 = sshll.u32 %s3, 4
      %s87 = int_to_ptr.hbm [resolvable:$true] %s86
      %89 = dma.vmem_to_hbm [thread:$0]  %s85, 128, %s87, [#allocation4]
    $region25: #{tpu_custom_call.1} parent=1 // pred_fallthru
      _
    // Predicated region
    $region26: #{tpu_custom_call.1} parent=1 // pred_check
      _
    $region27: #{tpu_custom_call.1} parent=1 // pred_check_branch
      %91 = sbr.rel (0) target = $region29
    $region28: #{tpu_custom_call.1} parent=1 // pred_region
      %93 = dma.done [#allocation4], 128
    $region29: #{tpu_custom_call.1} parent=1 // pred_fallthru
      _
    %94 = vsyncpa [#allocation3], 1
    %95 = vsyncpa [#allocation6], 1
    %96 = vsyncpa [#allocation4], 1

</llo_original>
